<compile_context>
chip_gen: v7x
topology: tpu7x:2x2x1
jax: 0.10.0
libtpu: 0.0.40
codegen_flags: <defaults>
</compile_context>

<pallas_src>
import math

import jax
import jax.numpy as jnp
from jax.experimental import pallas as pl
from jax.experimental.pallas import tpu as pltpu

# Deterministic weights from MaskedGradient._init_weights(): taps [1, 0, -1]
# (used only by the XLA reference; the kernel hard-codes the subtraction).
WEIGHTS_DX = (1.0, 0.0, -1.0)
WEIGHTS_DY = (1.0, 0.0, -1.0)
EPS_COMBINE = 1e-4   # _combine_gradient_xy eps
GROUPS = 3

_LANES = 128
_BLOCK_BUDGET_BYTES = 1 << 20   # ~1 MiB per input block (x 2in + 2out, double-buffered)


def _mod(idx, m):
    if m & (m - 1) == 0:                      # power of two -> cheap AND
        return jnp.bitwise_and(idx, m - 1)
    return jnp.remainder(idx, m)


def _make_kernel(H, W, L):
    """Kernel over a (TR, L) slab: TR = c*H stacked rows, L = k*W packed lanes."""

    def kernel(x_ref, t_ref, ig_ref, tg_ref, loss_ref):
        TR = x_ref.shape[0]

        # Boundary masks, built once per grid step, shared by both grad_mag calls.
        col = jax.lax.broadcasted_iota(jnp.int32, (TR, L), 1)
        row = jax.lax.broadcasted_iota(jnp.int32, (TR, L), 0)
        if L != W:
            col = _mod(col, W)                # position inside each packed image
        if TR != H:
            row = _mod(row, H)
        x_valid = jnp.logical_and(col > 0, col < W - 1)
        y_valid = jnp.logical_and(row > 0, row < H - 1)

        def grad_mag(a):
            a = a.astype(jnp.float32)
            # Taps [1, 0, -1] strength-reduced to a single subtraction.
            # Wraparound across image segments lands only on masked border
            # columns/rows, matching the F.pad(..., 0) of the reference.
            gx = pltpu.roll(a, 1, axis=1) - pltpu.roll(a, L - 1, axis=1)
            gx = jnp.where(x_valid, gx, 0.0)
            gy = pltpu.roll(a, 1, axis=0) - pltpu.roll(a, TR - 1, axis=0)
            gy = jnp.where(y_valid, gy, 0.0)
            return jnp.sqrt(gx * gx + gy * gy + EPS_COMBINE)

        ig = grad_mag(x_ref[...])
        tg = grad_mag(t_ref[...])
        ig_ref[...] = ig.astype(ig_ref.dtype)
        tg_ref[...] = tg.astype(tg_ref.dtype)

        # Per-block L1 partial sum broadcast into a lane-dense (8, 128) tile.
        # No resident accumulator -> the grid axis can stay "parallel".
        partial = jnp.sum(jnp.abs(ig - tg))
        loss_ref[...] = partial + jnp.zeros(loss_ref.shape, jnp.float32)

    return kernel


def masked_gradient(inputs, targets):
    """Forward pass of MaskedGradient. Returns (loss, inputs_grad, targets_mask)."""
    B, C, H, W = inputs.shape
    assert C % GROUPS == 0, "opt.nc must be divisible by groups=3"
    gch = C // GROUPS
    N = B * GROUPS

    if gch == 1:
        # nc == 3: group-sum is the identity -> pure reshape, keep source dtype
        # (halves input DMA for bf16 models; cast to f32 happens in-kernel).
        x = inputs.reshape(N, H, W)
        t = targets.reshape(N, H, W)
    else:
        # Identical taps for every (out,in) pair -> sum channels within a group.
        x = inputs.astype(jnp.float32).reshape(B, GROUPS, gch, H, W).sum(axis=2).reshape(N, H, W)
        t = targets.astype(jnp.float32).reshape(B, GROUPS, gch, H, W).sum(axis=2).reshape(N, H, W)

    # Lane packing: k images side-by-side on the 128-lane axis when W | 128.
    k = _LANES // W if (W < _LANES and _LANES % W == 0) else 1
    L = k * W

    # Rows per block: c whole slabs (TR = c*H), ~_BLOCK_BUDGET_BYTES per input
    # block, TR forced to a multiple of 8 for the (8, 128) tiling rule.
    # TODO(synk): for single images too large for one block (H*L*4 >> VMEM on
    # v7x), add within-image H tiling with a 1-row halo instead of whole slabs.
    M0 = (N + k - 1) // k
    max_c = max(1, _BLOCK_BUDGET_BYTES // (H * L * 4))
    c = min(M0, max_c)
    req = 8 // math.gcd(H, 8)                  # smallest c with (c*H) % 8 == 0
    c = max(req, (c // req) * req)
    G = (M0 + c - 1) // c                      # number of grid steps
    Mpad = G * c                               # slab count padded to c-multiple
    TR = c * H
    Npad = Mpad * k

    if Npad != N:
        # Zero-padded slabs give ig == tg == sqrt(eps) -> 0 contribution to the
        # L1 sum; their gradient outputs are sliced off below.
        x = jnp.pad(x, ((0, Npad - N), (0, 0), (0, 0)))
        t = jnp.pad(t, ((0, Npad - N), (0, 0), (0, 0)))

    def pack(a):    # (Npad, H, W) -> (Mpad*H, k*W): k images per lane row
        return a.reshape(Mpad, k, H, W).transpose(0, 2, 1, 3).reshape(Mpad * H, L)

    def unpack(a):  # inverse of pack, dropping the padded slabs
        return a.reshape(Mpad, H, k, W).transpose(0, 2, 1, 3).reshape(Npad, H, W)[:N]

    xp = pack(x)
    tp = pack(t)

    out_dtype = inputs.dtype
    kernel = _make_kernel(H, W, L)

    slab = pl.BlockSpec((TR, L), lambda i: (i, 0))
    loss_spec = pl.BlockSpec((8, _LANES), lambda i: (i, 0))

    # 2 inputs + 2 big outputs, double-buffered, f32 upper bound + slack.
    vmem_needed = 4 * 2 * (TR * L * 4) + (1 << 20)
    vmem_limit = int(min(max(32 << 20, vmem_needed), 100 << 20))

    ig_p, tg_p, partials = pl.pallas_call(
        kernel,
        out_shape=(jax.ShapeDtypeStruct((Mpad * H, L), out_dtype),
                   jax.ShapeDtypeStruct((Mpad * H, L), out_dtype),
                   jax.ShapeDtypeStruct((G * 8, _LANES), jnp.float32)),
        grid_spec=pltpu.PrefetchScalarGridSpec(
            num_scalar_prefetch=0,
            grid=(G,),
            in_specs=[slab, slab],
            out_specs=[slab, slab, loss_spec],
        ),
        compiler_params=pltpu.CompilerParams(
            dimension_semantics=("parallel",),
            vmem_limit_bytes=vmem_limit),
    )(xp, tp)

    # mean over (B,C,H,W) == mean over (N,H,W): channels within a group are identical.
    loss = jnp.sum(partials[0::8, 0]) * (1.0 / float(N * H * W))

    ig = unpack(ig_p)
    tg = unpack(tg_p)
    if gch == 1:
        ig_full = ig.reshape(B, C, H, W)
        tg_full = tg.reshape(B, C, H, W)
    else:
        # NOTE: materializing gch identical copies multiplies output HBM writes
        # by gch; fuse into the consumer where possible.
        ig_full = jnp.broadcast_to(ig.reshape(B, GROUPS, 1, H, W),
                                   (B, GROUPS, gch, H, W)).reshape(B, C, H, W)
        tg_full = jnp.broadcast_to(tg.reshape(B, GROUPS, 1, H, W),
                                   (B, GROUPS, gch, H, W)).reshape(B, C, H, W)
    return loss, ig_full, tg_full


def _reference(inputs, targets):
    """Independent pure-JAX/XLA reference matching the PyTorch module."""
    B, C, H, W = inputs.shape
    wdx = jnp.tile(jnp.array(WEIGHTS_DX, jnp.float32).reshape(1, 1, 1, 3),
                   (C, C // GROUPS, 1, 1))
    wdy = jnp.tile(jnp.array(WEIGHTS_DY, jnp.float32).reshape(1, 1, 3, 1),
                   (C, C // GROUPS, 1, 1))
    dn = ('NCHW', 'OIHW', 'NCHW')

    def dx(a):
        return jax.lax.conv_general_dilated(a, wdx, (1, 1), 'VALID',
                                            dimension_numbers=dn,
                                            feature_group_count=GROUPS)

    def dy(a):
        return jax.lax.conv_general_dilated(a, wdy, (1, 1), 'VALID',
                                            dimension_numbers=dn,
                                            feature_group_count=GROUPS)

    def combine(gx, gy):
        return jnp.sqrt(gx * gx + gy * gy + EPS_COMBINE)

    ig = combine(jnp.pad(dx(inputs), ((0, 0), (0, 0), (0, 0), (1, 1))),
                 jnp.pad(dy(inputs), ((0, 0), (0, 0), (1, 1), (0, 0))))
    tg = combine(jnp.pad(dx(targets), ((0, 0), (0, 0), (0, 0), (1, 1))),
                 jnp.pad(dy(targets), ((0, 0), (0, 0), (1, 1), (0, 0))))
    return jnp.mean(jnp.abs(ig - tg)), ig, tg


if __name__ == "__main__":
    key = jax.random.PRNGKey(0)
    k1, k2 = jax.random.split(key)
    B, C, H, W = 2, 3, 16, 16   # opt.nc = 3
    inputs = jax.random.normal(k1, (B, C, H, W), dtype=jnp.float32)
    targets = jax.random.normal(k2, (B, C, H, W), dtype=jnp.float32)

    loss, inputs_grad, targets_mask = masked_gradient(inputs, targets)
    jax.block_until_ready((loss, inputs_grad, targets_mask))

    ref_loss, ref_ig, ref_tg = _reference(inputs, targets)
    assert jnp.allclose(loss, ref_loss, atol=1e-5), (loss, ref_loss)
    assert jnp.allclose(inputs_grad, ref_ig, atol=1e-5)
    assert jnp.allclose(targets_mask, ref_tg, atol=1e-5)
    print("KERNEL_OK")
</pallas_src>

<mosaic_0001>
module attributes {stable_mosaic.version = 11 : i64} {
  func.func @kernel(%arg0: i32, %arg1: memref<16x128xf32, #tpu.memory_space<vmem>>, %arg2: memref<16x128xf32, #tpu.memory_space<vmem>>, %arg3: memref<16x128xf32, #tpu.memory_space<vmem>>, %arg4: memref<16x128xf32, #tpu.memory_space<vmem>>, %arg5: memref<8x128xf32, #tpu.memory_space<vmem>>) attributes {dimension_semantics = [#tpu.dimension_semantics<parallel>], iteration_bounds = array<i64: 1>, scalar_prefetch = 0 : i64, scratch_operands = 0 : i64, tpu.core_type = #tpu.core_type<tc>, window_params = [{transform_indices = @transform_0, window_bounds = array<i64: 16, 128>}, {transform_indices = @transform_1, window_bounds = array<i64: 16, 128>}, {transform_indices = @transform_2, window_bounds = array<i64: 16, 128>}, {transform_indices = @transform_3, window_bounds = array<i64: 16, 128>}, {transform_indices = @transform_4, window_bounds = array<i64: 8, 128>}]} {
    %0 = tpu.iota {dimensions = array<i32: 1>} : vector<16x128xi32>
    %1 = tpu.iota {dimensions = array<i32: 0>} : vector<16x128xi32>
    %c15_i32 = arith.constant 15 : i32
    %2 = vector.broadcast %c15_i32 : i32 to vector<16x128xi32>
    %3 = arith.andi %0, %2 : vector<16x128xi32>
    %c0_i32 = arith.constant 0 : i32
    %4 = vector.broadcast %c0_i32 : i32 to vector<16x128xi32>
    %5 = arith.cmpi sgt, %3, %4 : vector<16x128xi32>
    %c15_i32_0 = arith.constant 15 : i32
    %6 = vector.broadcast %c15_i32_0 : i32 to vector<16x128xi32>
    %7 = arith.cmpi slt, %3, %6 : vector<16x128xi32>
    %8 = arith.andi %5, %7 : vector<16x128xi1>
    %c0_i32_1 = arith.constant 0 : i32
    %9 = vector.broadcast %c0_i32_1 : i32 to vector<16x128xi32>
    %10 = arith.cmpi sgt, %1, %9 : vector<16x128xi32>
    %c15_i32_2 = arith.constant 15 : i32
    %11 = vector.broadcast %c15_i32_2 : i32 to vector<16x128xi32>
    %12 = arith.cmpi slt, %1, %11 : vector<16x128xi32>
    %13 = arith.andi %10, %12 : vector<16x128xi1>
    %c0 = arith.constant 0 : index
    %c0_3 = arith.constant 0 : index
    %14 = vector.load %arg1[%c0, %c0_3] : memref<16x128xf32, #tpu.memory_space<vmem>>, vector<16x128xf32>
    %c1_i32 = arith.constant 1 : i32
    %15 = tpu.dynamic_rotate %14 by %c1_i32 dim 1 : vector<16x128xf32>, i32 -> vector<16x128xf32>
    %c127_i32 = arith.constant 127 : i32
    %16 = tpu.dynamic_rotate %14 by %c127_i32 dim 1 : vector<16x128xf32>, i32 -> vector<16x128xf32>
    %17 = arith.subf %15, %16 : vector<16x128xf32>
    %cst = arith.constant 0.000000e+00 : f32
    %18 = vector.broadcast %cst : f32 to vector<16x128xf32>
    %19 = arith.select %8, %17, %18 : vector<16x128xi1>, vector<16x128xf32>
    %c1_i32_4 = arith.constant 1 : i32
    %20 = tpu.dynamic_rotate %14 by %c1_i32_4 dim 0 : vector<16x128xf32>, i32 -> vector<16x128xf32>
    %c15_i32_5 = arith.constant 15 : i32
    %21 = tpu.dynamic_rotate %14 by %c15_i32_5 dim 0 : vector<16x128xf32>, i32 -> vector<16x128xf32>
    %22 = arith.subf %20, %21 : vector<16x128xf32>
    %cst_6 = arith.constant 0.000000e+00 : f32
    %23 = vector.broadcast %cst_6 : f32 to vector<16x128xf32>
    %24 = arith.select %13, %22, %23 : vector<16x128xi1>, vector<16x128xf32>
    %25 = arith.mulf %19, %19 : vector<16x128xf32>
    %26 = arith.mulf %24, %24 : vector<16x128xf32>
    %27 = arith.addf %25, %26 : vector<16x128xf32>
    %cst_7 = arith.constant 9.99999974E-5 : f32
    %28 = vector.broadcast %cst_7 : f32 to vector<16x128xf32>
    %29 = arith.addf %27, %28 : vector<16x128xf32>
    %30 = math.sqrt %29 : vector<16x128xf32>
    %c0_8 = arith.constant 0 : index
    %c0_9 = arith.constant 0 : index
    %31 = vector.load %arg2[%c0_8, %c0_9] : memref<16x128xf32, #tpu.memory_space<vmem>>, vector<16x128xf32>
    %c1_i32_10 = arith.constant 1 : i32
    %32 = tpu.dynamic_rotate %31 by %c1_i32_10 dim 1 : vector<16x128xf32>, i32 -> vector<16x128xf32>
    %c127_i32_11 = arith.constant 127 : i32
    %33 = tpu.dynamic_rotate %31 by %c127_i32_11 dim 1 : vector<16x128xf32>, i32 -> vector<16x128xf32>
    %34 = arith.subf %32, %33 : vector<16x128xf32>
    %cst_12 = arith.constant 0.000000e+00 : f32
    %35 = vector.broadcast %cst_12 : f32 to vector<16x128xf32>
    %36 = arith.select %8, %34, %35 : vector<16x128xi1>, vector<16x128xf32>
    %c1_i32_13 = arith.constant 1 : i32
    %37 = tpu.dynamic_rotate %31 by %c1_i32_13 dim 0 : vector<16x128xf32>, i32 -> vector<16x128xf32>
    %c15_i32_14 = arith.constant 15 : i32
    %38 = tpu.dynamic_rotate %31 by %c15_i32_14 dim 0 : vector<16x128xf32>, i32 -> vector<16x128xf32>
    %39 = arith.subf %37, %38 : vector<16x128xf32>
    %cst_15 = arith.constant 0.000000e+00 : f32
    %40 = vector.broadcast %cst_15 : f32 to vector<16x128xf32>
    %41 = arith.select %13, %39, %40 : vector<16x128xi1>, vector<16x128xf32>
    %42 = arith.mulf %36, %36 : vector<16x128xf32>
    %43 = arith.mulf %41, %41 : vector<16x128xf32>
    %44 = arith.addf %42, %43 : vector<16x128xf32>
    %cst_16 = arith.constant 9.99999974E-5 : f32
    %45 = vector.broadcast %cst_16 : f32 to vector<16x128xf32>
    %46 = arith.addf %44, %45 : vector<16x128xf32>
    %47 = math.sqrt %46 : vector<16x128xf32>
    %c0_17 = arith.constant 0 : index
    %c0_18 = arith.constant 0 : index
    %48 = vector.load %arg3[%c0_17, %c0_18] : memref<16x128xf32, #tpu.memory_space<vmem>>, vector<16x128xf32>
    tpu.vector_store %arg3[%c0_17, %c0_18], %30 {strides = array<i32>} : memref<16x128xf32, #tpu.memory_space<vmem>>, vector<16x128xf32>,
    %c0_19 = arith.constant 0 : index
    %c0_20 = arith.constant 0 : index
    %49 = vector.load %arg4[%c0_19, %c0_20] : memref<16x128xf32, #tpu.memory_space<vmem>>, vector<16x128xf32>
    tpu.vector_store %arg4[%c0_19, %c0_20], %47 {strides = array<i32>} : memref<16x128xf32, #tpu.memory_space<vmem>>, vector<16x128xf32>,
    %50 = arith.subf %30, %47 : vector<16x128xf32>
    %51 = math.absf %50 : vector<16x128xf32>
    %52 = vector.shape_cast %51 : vector<16x128xf32> to vector<1x16x128xf32>
    %cst_21 = arith.constant dense<0.000000e+00> : vector<1xf32>
    %53 = vector.multi_reduction <add>, %52, %cst_21 [1, 2] : vector<1x16x128xf32> to vector<1xf32>
    %54 = vector.shape_cast %53 : vector<1xf32> to vector<1x1x1xf32>
    %55 = vector.extract %54[0, 0, 0] : f32 from vector<1x1x1xf32>
    %cst_22 = arith.constant 0.000000e+00 : f32
    %56 = vector.broadcast %cst_22 : f32 to vector<8x128xf32>
    %57 = vector.broadcast %55 : f32 to vector<8x128xf32>
    %58 = arith.addf %57, %56 : vector<8x128xf32>
    %c0_23 = arith.constant 0 : index
    %c0_24 = arith.constant 0 : index
    %59 = vector.load %arg5[%c0_23, %c0_24] : memref<8x128xf32, #tpu.memory_space<vmem>>, vector<8x128xf32>
    tpu.vector_store %arg5[%c0_23, %c0_24], %58 {strides = array<i32>} : memref<8x128xf32, #tpu.memory_space<vmem>>, vector<8x128xf32>,
    return
  }
  func.func @transform_0(%arg0: i32) -> (i32, i32) {
    %c0_i32 = arith.constant 0 : i32
    %c0_i32_0 = arith.constant 0 : i32
    return %arg0, %c0_i32 : i32, i32
  }
  func.func @transform_1(%arg0: i32) -> (i32, i32) {
    %c0_i32 = arith.constant 0 : i32
    %c0_i32_0 = arith.constant 0 : i32
    return %arg0, %c0_i32 : i32, i32
  }
  func.func @transform_2(%arg0: i32) -> (i32, i32) {
    %c0_i32 = arith.constant 0 : i32
    %c0_i32_0 = arith.constant 0 : i32
    return %arg0, %c0_i32 : i32, i32
  }
  func.func @transform_3(%arg0: i32) -> (i32, i32) {
    %c0_i32 = arith.constant 0 : i32
    %c0_i32_0 = arith.constant 0 : i32
    return %arg0, %c0_i32 : i32, i32
  }
  func.func @transform_4(%arg0: i32) -> (i32, i32) {
    %c0_i32 = arith.constant 0 : i32
    %c0_i32_0 = arith.constant 0 : i32
    return %arg0, %c0_i32 : i32, i32
  }
}

</mosaic_0001>

<llo_original>
// kernel: tpu_custom_call.1
$region0: #{tpu_custom_call.1}
  #allocation0 [shape = 'u32[]', space=smem, size = 0x4, offset = 0x4, fixed_abs, tag = 'smem constant byte address 0x4 - core index']
  #allocation1 [shape = 'u32[144,128]{1,0:T(1,128)}', space=vmem, size = 0x12000, scoped, tag = 'internal scratch']
  %s0 = inlined_call_operand.hbm [shape: f32[16,128], index: 0, kind: input, shape index: {}]
  %s1 = inlined_call_operand.hbm [shape: f32[16,128], index: 1, kind: input, shape index: {}]
  %s2 = inlined_call_operand.hbm [shape: f32[16,128], index: 2, kind: output, shape index: {0}]
  %s3 = inlined_call_operand.hbm [shape: f32[16,128], index: 3, kind: output, shape index: {1}]
  %s4 = inlined_call_operand.hbm [shape: f32[8,128], index: 4, kind: output, shape index: {2}]
  %5 = xla_tuple %s2, %s3, %s4
  %s6 = sld [smem:[#allocation0]]
  $region42: #{tpu_custom_call.1} parent=0
    _
  %s8 = ssub.s32 1, %s6
  %s9 = scalar_select 0, %s8, %s6
  $region1: #{tpu_custom_call.1} parent=0
    #allocation2 [shape = 'u8[8192]{0}', space=vmem, size = 0x2000, scoped, tag = 'input window, operand 0, single buffered']
    #allocation3 [shape = 's32[1]{0}', space=sflag, size = 0x4, scoped, tag = 'scoped memory for tpu_custom_call.1']
    #allocation4 [shape = 's32[1]{0}', space=sflag, size = 0x4, scoped, tag = 'scoped memory for tpu_custom_call.1']
    #allocation5 [shape = 'u8[8192]{0}', space=vmem, size = 0x2000, scoped, tag = 'input window, operand 1, single buffered']
    #allocation6 [shape = 's32[1]{0}', space=sflag, size = 0x4, scoped, tag = 'scoped memory for tpu_custom_call.1']
    #allocation7 [shape = 'u8[8192]{0}', space=vmem, size = 0x2000, scoped, tag = 'output window, operand 0, single buffered']
    #allocation8 [shape = 'u8[8192]{0}', space=vmem, size = 0x2000, scoped, tag = 'output window, operand 1, single buffered']
    #allocation9 [shape = 's32[1]{0}', space=sflag, size = 0x4, scoped, tag = 'scoped memory for tpu_custom_call.1']
    #allocation10 [shape = 'u8[4096]{0}', space=vmem, size = 0x1000, scoped, tag = 'output window, operand 2, single buffered']
    %10 = vsyncpa [#allocation3], 0
    %11 = vsyncpa [#allocation6], 0
    %12 = vsyncpa [#allocation4], 0
    %13 = vsyncpa [#allocation9], 0
    // Predicated region
    $region2: #{tpu_custom_call.1} parent=1 // pred_check
      _
    $region3: #{tpu_custom_call.1} parent=1 // pred_check_branch
      %15 = sbr.rel (0) target = $region5
    $region4: #{tpu_custom_call.1} parent=1 // pred_region
      %s17 = ssub.s32 256, 256
      %18 = vsyncadd [#allocation3], %s17
      %s19 = sshll.u32 [#allocation2], 4
      %s20 = int_to_ptr.vmem [resolvable:$true] %s19
      %25 = dma.hbm_to_vmem [thread:$0]  %s0, 256, %s20, [#allocation3], 128, 128, 8
    $region5: #{tpu_custom_call.1} parent=1 // pred_fallthru
      _
    // Predicated region
    $region6: #{tpu_custom_call.1} parent=1 // pred_check
      _
    $region7: #{tpu_custom_call.1} parent=1 // pred_check_branch
      %27 = sbr.rel (0) target = $region9
    $region8: #{tpu_custom_call.1} parent=1 // pred_region
      %s29 = ssub.s32 256, 256
      %30 = vsyncadd [#allocation6], %s29
      %s31 = sshll.u32 [#allocation5], 4
      %s32 = int_to_ptr.vmem [resolvable:$true] %s31
      %37 = dma.hbm_to_vmem [thread:$0]  %s1, 256, %s32, [#allocation6], 128, 128, 8
    $region9: #{tpu_custom_call.1} parent=1 // pred_fallthru
      _
    // Predicated region
    $region10: #{tpu_custom_call.1} parent=1 // pred_check
      _
    $region11: #{tpu_custom_call.1} parent=1 // pred_check_branch
      %39 = sbr.rel (0) target = $region13
    $region12: #{tpu_custom_call.1} parent=1 // pred_region
      %40 = dma.done [#allocation3], 256
    $region13: #{tpu_custom_call.1} parent=1 // pred_fallthru
      _
    // Predicated region
    $region14: #{tpu_custom_call.1} parent=1 // pred_check
      _
    $region15: #{tpu_custom_call.1} parent=1 // pred_check_branch
      %42 = sbr.rel (0) target = $region17
    $region16: #{tpu_custom_call.1} parent=1 // pred_region
      %43 = dma.done [#allocation6], 256
    $region17: #{tpu_custom_call.1} parent=1 // pred_fallthru
      _
    %v44 = vlaneseq
    %v45 = vand.u32 %v44, 127
    %v46 = vlaneseq
    %v47 = vshrl.u32 %v46, 7
    %v48 = vadd.s32 %v47, 8
    %v49 = vand.u32 %v45, 15
    %vm50 = vcmp.gt.s32.totalorder %v49, 0
    %vm51 = vcmp.lt.s32.totalorder %v49, 15
    %vm52 = vmand %vm50, %vm51
    %vm53 = vcmp.gt.s32.totalorder %v47, 0
    %vm54 = vcmp.gt.s32.totalorder %v48, 0
    %vm55 = vcmp.lt.s32.totalorder %v47, 15
    %vm56 = vcmp.lt.s32.totalorder %v48, 15
    %vm57 = vmand %vm53, %vm55
    %vm58 = vmand %vm54, %vm56
    %v59 = vld [vmem:[#allocation2] sm:$0xff]
    %v60 = vld [vmem:[#allocation2 + $0x8] sm:$0xff]
    %61 = vrot.lane.b32.xlu0 %v59, 1
    %v62 = vpop.permute.xlu0 %61
    %63 = vrot.lane.b32.xlu0 %v60, 1
    %v64 = vpop.permute.xlu0 %63
    %65 = vrot.lane.b32.xlu0 %v59, 127
    %v66 = vpop.permute.xlu0 %65
    %67 = vrot.lane.b32.xlu0 %v60, 127
    %v68 = vpop.permute.xlu0 %67
    %v69 = vsub.f32 %v62, %v66
    %v70 = vsub.f32 %v64, %v68
    %v71 = vsel %vm52, %v69, 0.0
    %v72 = vsel %vm52, %v70, 0.0
    %v73 = vrot.slane %v59, 7
    %v74 = vrot.slane %v60, 7
    %vm75 = vcmp.lt.s32.totalorder %v47, 1
    %v76 = vsel %vm75, %v73, %v74
    %v77 = vsel %vm75, %v74, %v73
    %v78 = vrot.slane %v59, 1
    %v79 = vrot.slane %v60, 1
    %vm80 = vcmp.lt.s32.totalorder %v47, 7
    %v81 = vsel %vm80, %v78, %v79
    %v82 = vsel %vm80, %v79, %v78
    %v83 = vsub.f32 %v77, %v81
    %v84 = vsub.f32 %v76, %v82
    %v85 = vsel %vm57, %v83, 0.0
    %v86 = vsel %vm58, %v84, 0.0
    %v87 = vmul.f32 %v71, %v71
    %v88 = vmul.f32 %v72, %v72
    %v89 = vmul.f32 %v85, %v85
    %v90 = vmul.f32 %v86, %v86
    %v91 = vadd.f32 %v87, %v89
    %v92 = vadd.f32 %v88, %v90
    %v93 = vadd.f32 %v91, 0.0001
    %v94 = vadd.f32 %v92, 0.0001
    %v95 = vrsqrt.pop %v93
    %v96 = vmul.f32 %v93, %v95
    %vm97 = vcmp.eq.f32.partialorder %v93, inf
    %v98 = vsel %vm97, %v93, %v96
    %vm99 = vcmp.eq.f32.partialorder %v93, 0.0
    %v100 = vand.u32 %v93, 2147483648
    %v101 = vsel %vm99, %v100, %v98
    %v102 = vrsqrt.pop %v94
    %v103 = vmul.f32 %v94, %v102
    %vm104 = vcmp.eq.f32.partialorder %v94, inf
    %v105 = vsel %vm104, %v94, %v103
    %vm106 = vcmp.eq.f32.partialorder %v94, 0.0
    %v107 = vand.u32 %v94, 2147483648
    %v108 = vsel %vm106, %v107, %v105
    %v109 = vld [vmem:[#allocation5] sm:$0xff]
    %v110 = vld [vmem:[#allocation5 + $0x8] sm:$0xff]
    %111 = vrot.lane.b32.xlu0 %v109, 1
    %v112 = vpop.permute.xlu0 %111
    %113 = vrot.lane.b32.xlu0 %v110, 1
    %v114 = vpop.permute.xlu0 %113
    %115 = vrot.lane.b32.xlu0 %v109, 127
    %v116 = vpop.permute.xlu0 %115
    %117 = vrot.lane.b32.xlu0 %v110, 127
    %v118 = vpop.permute.xlu0 %117
    %v119 = vsub.f32 %v112, %v116
    %v120 = vsub.f32 %v114, %v118
    %v121 = vsel %vm52, %v119, 0.0
    %v122 = vsel %vm52, %v120, 0.0
    %v123 = vrot.slane %v109, 7
    %v124 = vrot.slane %v110, 7
    %v125 = vsel %vm75, %v123, %v124
    %v126 = vsel %vm75, %v124, %v123
    %v127 = vrot.slane %v109, 1
    %v128 = vrot.slane %v110, 1
    %v129 = vsel %vm80, %v127, %v128
    %v130 = vsel %vm80, %v128, %v127
    %v131 = vsub.f32 %v126, %v129
    %v132 = vsub.f32 %v125, %v130
    %v133 = vsel %vm57, %v131, 0.0
    %v134 = vsel %vm58, %v132, 0.0
    %v135 = vmul.f32 %v121, %v121
    %v136 = vmul.f32 %v122, %v122
    %v137 = vmul.f32 %v133, %v133
    %v138 = vmul.f32 %v134, %v134
    %v139 = vadd.f32 %v135, %v137
    %v140 = vadd.f32 %v136, %v138
    %v141 = vadd.f32 %v139, 0.0001
    %v142 = vadd.f32 %v140, 0.0001
    %v143 = vrsqrt.pop %v141
    %v144 = vmul.f32 %v141, %v143
    %vm145 = vcmp.eq.f32.partialorder %v141, inf
    %v146 = vsel %vm145, %v141, %v144
    %vm147 = vcmp.eq.f32.partialorder %v141, 0.0
    %v148 = vand.u32 %v141, 2147483648
    %v149 = vsel %vm147, %v148, %v146
    %v150 = vrsqrt.pop %v142
    %v151 = vmul.f32 %v142, %v150
    %vm152 = vcmp.eq.f32.partialorder %v142, inf
    %v153 = vsel %vm152, %v142, %v151
    %vm154 = vcmp.eq.f32.partialorder %v142, 0.0
    %v155 = vand.u32 %v142, 2147483648
    %v156 = vsel %vm154, %v155, %v153
    %157 = vst [vmem:[#allocation7] sm:$0xff] %v101
    %158 = vst [vmem:[#allocation7 + $0x8] sm:$0xff] %v108
    %159 = vst [vmem:[#allocation8] sm:$0xff] %v149
    %160 = vst [vmem:[#allocation8 + $0x8] sm:$0xff] %v156
    %v161 = vsub.f32 %v101, %v149
    %v162 = vsub.f32 %v108, %v156
    %v163 = vand.u32 2147483647, %v161
    %v164 = vand.u32 2147483647, %v162
    %v165 = vadd.f32 %v163, %v164
    %166 = vadd.xlane.f32.xlu0 %v165
    %v167 = vpop.xlane.xlu0 %166
    %v168 = vrot.slane %v167, 4
    %v169 = vadd.f32 %v167, %v168
    %v170 = vrot.slane %v169, 2
    %v171 = vadd.f32 %v169, %v170
    %v172 = vrot.slane %v171, 1
    %v173 = vadd.f32 %v171, %v172
    %s174 = vtos %v173
    %v175 = vstv %s174
    %v176 = vadd.f32 %v175, 0.0
    %177 = vst [vmem:[#allocation10] sm:$0xff] %v176
    // Predicated region
    $region18: #{tpu_custom_call.1} parent=1 // pred_check
      _
    $region19: #{tpu_custom_call.1} parent=1 // pred_check_branch
      %179 = sbr.rel (0) target = $region21
    $region20: #{tpu_custom_call.1} parent=1 // pred_region
      %s181 = ssub.s32 256, 256
      %182 = vsyncadd [#allocation4], %s181
      %s183 = sshll.u32 [#allocation7], 4
      %s184 = int_to_ptr.vmem [resolvable:$true] %s183
      %189 = dma.vmem_to_hbm [thread:$0]  %s184, 256, %s2, [#allocation4], 128, 128, 8
    $region21: #{tpu_custom_call.1} parent=1 // pred_fallthru
      _
    // Predicated region
    $region22: #{tpu_custom_call.1} parent=1 // pred_check
      _
    $region23: #{tpu_custom_call.1} parent=1 // pred_check_branch
      %191 = sbr.rel (0) target = $region25
    $region24: #{tpu_custom_call.1} parent=1 // pred_region
      %s193 = ssub.s32 256, 256
      %194 = vsyncadd [#allocation9], %s193
      %s195 = sshll.u32 [#allocation8], 4
      %s196 = int_to_ptr.vmem [resolvable:$true] %s195
      %201 = dma.vmem_to_hbm [thread:$0]  %s196, 256, %s3, [#allocation9], 128, 128, 8
    $region25: #{tpu_custom_call.1} parent=1 // pred_fallthru
      _
    // Predicated region
    $region26: #{tpu_custom_call.1} parent=1 // pred_check
      _
    $region27: #{tpu_custom_call.1} parent=1 // pred_check_branch
      %203 = sbr.rel (0) target = $region29
    $region28: #{tpu_custom_call.1} parent=1 // pred_region
      %s205 = ssub.s32 128, 128
      %206 = vsyncadd [#allocation9], %s205
      %s208 = sshll.u32 [#allocation10], 4
      %s209 = int_to_ptr.vmem [resolvable:$true] %s208
      %211 = dma.vmem_to_hbm [thread:$0]  %s209, 128, %s4, [#allocation9]
    $region29: #{tpu_custom_call.1} parent=1 // pred_fallthru
      _
    // Predicated region
    $region30: #{tpu_custom_call.1} parent=1 // pred_check
      _
    $region31: #{tpu_custom_call.1} parent=1 // pred_check_branch
      %213 = sbr.rel (0) target = $region33
    $region32: #{tpu_custom_call.1} parent=1 // pred_region
      %214 = dma.done [#allocation4], 256
    $region33: #{tpu_custom_call.1} parent=1 // pred_fallthru
      _
    // Predicated region
    $region34: #{tpu_custom_call.1} parent=1 // pred_check
      _
    $region35: #{tpu_custom_call.1} parent=1 // pred_check_branch
      %216 = sbr.rel (0) target = $region37
    $region36: #{tpu_custom_call.1} parent=1 // pred_region
      %217 = dma.done [#allocation9], 256
    $region37: #{tpu_custom_call.1} parent=1 // pred_fallthru
      _
    // Predicated region
    $region38: #{tpu_custom_call.1} parent=1 // pred_check
      _
    $region39: #{tpu_custom_call.1} parent=1 // pred_check_branch
      %219 = sbr.rel (0) target = $region41
    $region40: #{tpu_custom_call.1} parent=1 // pred_region
      %220 = dma.done [#allocation9], 128
    $region41: #{tpu_custom_call.1} parent=1 // pred_fallthru
      _
    %221 = vsyncpa [#allocation3], 1
    %222 = vsyncpa [#allocation6], 1
    %223 = vsyncpa [#allocation4], 1
    %224 = vsyncpa [#allocation9], 1

</llo_original>
